<compile_context>
chip_gen: v7x
topology: tpu7x:2x2x1
jax: 0.10.0
libtpu: 0.0.40
codegen_flags: <defaults>
</compile_context>

<pallas_src>
import jax
import jax.numpy as jnp
from jax.experimental import pallas as pl
from jax.experimental.pallas import tpu as pltpu


# ---------------------------------------------------------------------------
# Kernel body
# ---------------------------------------------------------------------------
def _outconv_kernel(x_ref, w_ref, b_ref, o_ref):
    # x_ref : (Cin, TN)   input tile  (spatial on the lane axis)
    # w_ref : (Cout, Cin) 1x1 conv weights (VMEM-resident across the grid)
    # b_ref : (Cout, 1)   bias            (VMEM-resident across the grid)
    # o_ref : (Cout, TN)  output tile (lane-dense -> unmasked vst)
    acc = jnp.dot(w_ref[...], x_ref[...], preferred_element_type=jnp.float32)
    acc = acc + b_ref[...]                       # broadcast (Cout, 1) -> (Cout, TN)
    o_ref[...] = acc.astype(o_ref.dtype)


def _round_up(x, m):
    return ((x + m - 1) // m) * m


def _pick_col_tile(hw, cin, cout, dtype_bytes, batch,
                   vmem_data_budget=36 * 1024 * 1024,
                   min_total_steps=4):
    """VMEM-budget-driven spatial tile (multiple of 128).

    The double-buffered x/out blocks cost 2*(cin+cout)*tn*dtype_bytes of VMEM.
    Grow tn until that hits the budget (amortizing per-grid-step overhead),
    but keep at least `min_total_steps` grid steps so both v7x TensorCores
    get work and the pipeline can still double-buffer.
    """
    hw128 = _round_up(hw, 128)

    # Budget-driven upper bound.
    tn_budget = vmem_data_budget // (2 * dtype_bytes * (cin + cout))
    tn = max(128, (tn_budget // 128) * 128)

    # Never exceed the (padded) spatial extent.
    tn = min(tn, hw128)

    # Keep >= min_total_steps total grid steps when the image allows it.
    min_cols = -(-min_total_steps // max(batch, 1))            # ceil(4 / B)
    tn_steps = max(128, ((hw128 // min_cols) // 128) * 128)
    tn = max(128, min(tn, tn_steps))
    return tn


# ---------------------------------------------------------------------------
# Wrapper
# ---------------------------------------------------------------------------
def outconv_pallas(x_nchw, w_oihw, bias, *, io_dtype=None):
    """Forward of `outconv` (1x1 Conv2d with bias).  NCHW in / NCHW out.

    io_dtype: optional narrower dtype (e.g. jnp.bfloat16) for HBM<->VMEM
    traffic of x / out; accumulation stays f32 inside the kernel and the
    returned array keeps the caller's dtype.
    """
    orig_dtype = x_nchw.dtype
    B, Cin, H, W = x_nchw.shape
    Cout = w_oihw.shape[0]
    HW = H * W

    if io_dtype is not None:
        x_nchw = x_nchw.astype(io_dtype)
        w_oihw = w_oihw.astype(io_dtype)
        bias = bias.astype(io_dtype)
    dtype = x_nchw.dtype
    dtype_bytes = jnp.dtype(dtype).itemsize

    tn = _pick_col_tile(HW, Cin, Cout, dtype_bytes, B)
    HW_pad = _round_up(HW, tn)          # full last tile -> unmasked stores
    n_col = HW_pad // tn

    # Free reshapes (no HBM movement); pad the spatial tail with zeros so
    # every block is lane-dense and VMEM stays bounded for arbitrary H*W.
    x2 = x_nchw.reshape(B, Cin, HW)
    if HW_pad != HW:
        x2 = jnp.pad(x2, ((0, 0), (0, 0), (0, HW_pad - HW)))
    w2 = w_oihw.reshape(Cout, Cin)      # (Cout, Cin, 1, 1) -> (Cout, Cin)
    b2 = bias.reshape(Cout, 1)

    grid_spec = pltpu.PrefetchScalarGridSpec(
        num_scalar_prefetch=0,
        grid=(B, n_col),
        in_specs=[
            # Batch axis squeezed: kernel sees plain 2D (Cin, tn) tiles.
            pl.BlockSpec((pl.Squeezed(), Cin, tn), lambda b, j: (b, 0, j)),
            pl.BlockSpec((Cout, Cin), lambda b, j: (0, 0)),   # resident
            pl.BlockSpec((Cout, 1), lambda b, j: (0, 0)),     # resident
        ],
        out_specs=pl.BlockSpec((pl.Squeezed(), Cout, tn), lambda b, j: (b, 0, j)),
    )

    cost = pl.CostEstimate(
        flops=2 * B * Cin * Cout * HW_pad,
        transcendentals=0,
        bytes_accessed=dtype_bytes * (B * HW_pad * (Cin + Cout) + Cout * (Cin + 1)),
    )

    out = pl.pallas_call(
        _outconv_kernel,
        out_shape=jax.ShapeDtypeStruct((B, Cout, HW_pad), dtype),
        grid_spec=grid_spec,
        compiler_params=pltpu.CompilerParams(
            dimension_semantics=("parallel", "parallel"),
            # Scoped default is 16/32 MiB; 48 MiB fits the budgeted tiles and
            # is safe on every generation (v7x physical VMEM = 64 MiB/TC).
            vmem_limit_bytes=48 * 1024 * 1024,
        ),
        cost_estimate=cost,
    )(x2, w2, b2)

    out = out[:, :, :HW].reshape(B, Cout, H, W)
    return out.astype(orig_dtype)


# ---------------------------------------------------------------------------
# Pure-JAX reference (matches PyTorch nn.Conv2d(in_ch, out_ch, 1))
# ---------------------------------------------------------------------------
def outconv_ref(x_nchw, w_oihw, bias):
    y = jax.lax.conv_general_dilated(
        x_nchw, w_oihw, window_strides=(1, 1), padding='VALID',
        dimension_numbers=('NCHW', 'OIHW', 'NCHW'),
        precision=jax.lax.Precision.HIGHEST)
    return y + bias[None, :, None, None]


if __name__ == "__main__":
    # Small deterministic config consistent with outconv's forward (NCHW).
    B, in_ch, out_ch, H, W = 2, 4, 2, 16, 16

    key = jax.random.PRNGKey(0)
    kx, kw, kb = jax.random.split(key, 3)

    x = jax.random.normal(kx, (B, in_ch, H, W), jnp.float32)

    # PyTorch Conv2d default init bounds (kaiming-uniform, fan_in = in_ch*1*1).
    fan_in = in_ch
    bound = 1.0 / (fan_in ** 0.5)
    w_oihw = jax.random.uniform(kw, (out_ch, in_ch, 1, 1), jnp.float32,
                                minval=-bound, maxval=bound)
    bias = jax.random.uniform(kb, (out_ch,), jnp.float32,
                              minval=-bound, maxval=bound)

    y = outconv_pallas(x, w_oihw, bias)
    jax.block_until_ready(y)

    y_ref = outconv_ref(x, w_oihw, bias)
    assert y.shape == (B, out_ch, H, W)
    # Tolerance covers TPU MXU f32 matmul pass precision (reference is exact f32).
    assert jnp.allclose(y, y_ref, atol=2e-2, rtol=2e-2), "outconv mismatch"

    print("KERNEL_OK")
</pallas_src>

<mosaic_0001>
module attributes {stable_mosaic.version = 11 : i64} {
  func.func @_outconv_kernel(%arg0: i32, %arg1: i32, %arg2: memref<1x4x128xf32, #tpu.memory_space<vmem>>, %arg3: memref<2x4xf32, #tpu.memory_space<vmem>>, %arg4: memref<2x1xf32, #tpu.memory_space<vmem>>, %arg5: memref<1x2x128xf32, #tpu.memory_space<vmem>>) attributes {dimension_semantics = [#tpu.dimension_semantics<parallel>, #tpu.dimension_semantics<parallel>], iteration_bounds = array<i64: 2, 2>, scalar_prefetch = 0 : i64, scratch_operands = 0 : i64, tpu.core_type = #tpu.core_type<tc>, window_params = [{transform_indices = @transform_0, window_bounds = array<i64: 1, 4, 128>}, {pipeline_mode = #tpu.pipeline_mode<synchronous>, transform_indices = @transform_1, window_bounds = array<i64: 2, 4>}, {pipeline_mode = #tpu.pipeline_mode<synchronous>, transform_indices = @transform_2, window_bounds = array<i64: 2, 1>}, {transform_indices = @transform_3, window_bounds = array<i64: 1, 2, 128>}]} {
    %c0 = arith.constant 0 : index
    %c0_0 = arith.constant 0 : index
    %0 = vector.load %arg3[%c0, %c0_0] : memref<2x4xf32, #tpu.memory_space<vmem>>, vector<2x4xf32>
    %c0_1 = arith.constant 0 : index
    %c0_2 = arith.constant 0 : index
    %c0_3 = arith.constant 0 : index
    %1 = vector.load %arg2[%c0_1, %c0_2, %c0_3] : memref<1x4x128xf32, #tpu.memory_space<vmem>>, vector<1x4x128xf32>
    %2 = vector.shape_cast %1 : vector<1x4x128xf32> to vector<4x128xf32>
    %cst = arith.constant dense<0.000000e+00> : vector<2x128xf32>
    %3 = tpu.matmul %0, %2, %cst {dimension_numbers = #tpu.dot_dimension_numbers<[1], [0], [0], [1], [0, 0, 1, 1], [], []>} : vector<2x4xf32>, vector<4x128xf32>, vector<2x128xf32> -> vector<2x128xf32>
    %c0_4 = arith.constant 0 : index
    %c0_5 = arith.constant 0 : index
    %4 = vector.load %arg4[%c0_4, %c0_5] : memref<2x1xf32, #tpu.memory_space<vmem>>, vector<2x1xf32>
    %5 = vector.broadcast %4 : vector<2x1xf32> to vector<2x128xf32>
    %6 = arith.addf %3, %5 : vector<2x128xf32>
    %c0_6 = arith.constant 0 : index
    %c0_7 = arith.constant 0 : index
    %c0_8 = arith.constant 0 : index
    %7 = vector.load %arg5[%c0_6, %c0_7, %c0_8] : memref<1x2x128xf32, #tpu.memory_space<vmem>>, vector<1x2x128xf32>
    %8 = vector.shape_cast %7 : vector<1x2x128xf32> to vector<2x128xf32>
    %9 = vector.shape_cast %6 : vector<2x128xf32> to vector<1x2x128xf32>
    tpu.vector_store %arg5[%c0_6, %c0_7, %c0_8], %9 {strides = array<i32>} : memref<1x2x128xf32, #tpu.memory_space<vmem>>, vector<1x2x128xf32>,
    return
  }
  func.func @transform_0(%arg0: i32, %arg1: i32) -> (i32, i32, i32) {
    %c0_i32 = arith.constant 0 : i32
    %c0_i32_0 = arith.constant 0 : i32
    return %arg0, %c0_i32, %arg1 : i32, i32, i32
  }
  func.func @transform_1(%arg0: i32, %arg1: i32) -> (i32, i32) {
    %c0_i32 = arith.constant 0 : i32
    %c0_i32_0 = arith.constant 0 : i32
    %c0_i32_1 = arith.constant 0 : i32
    return %c0_i32, %c0_i32_0 : i32, i32
  }
  func.func @transform_2(%arg0: i32, %arg1: i32) -> (i32, i32) {
    %c0_i32 = arith.constant 0 : i32
    %c0_i32_0 = arith.constant 0 : i32
    %c0_i32_1 = arith.constant 0 : i32
    return %c0_i32, %c0_i32_0 : i32, i32
  }
  func.func @transform_3(%arg0: i32, %arg1: i32) -> (i32, i32, i32) {
    %c0_i32 = arith.constant 0 : i32
    %c0_i32_0 = arith.constant 0 : i32
    return %arg0, %c0_i32, %arg1 : i32, i32, i32
  }
}

</mosaic_0001>

<llo_original>
// kernel: tpu_custom_call.1
$region0: #{tpu_custom_call.1}
  #allocation0 [shape = 'u32[]', space=smem, size = 0x4, offset = 0x4, fixed_abs, tag = 'smem constant byte address 0x4 - core index']
  #allocation1 [shape = 'u32[144,128]{1,0:T(1,128)}', space=vmem, size = 0x12000, scoped, tag = 'internal scratch']
  %s0 = inlined_call_operand.hbm [shape: f32[2,4,256], index: 0, kind: input, shape index: {}]
  %s1 = inlined_call_operand.vmem [shape: f32[2,4], index: 1, kind: input, shape index: {}]
  %s2 = inlined_call_operand.vmem [shape: f32[2,1], index: 2, kind: input, shape index: {}]
  %s3 = inlined_call_operand.hbm [shape: f32[2,2,256], index: 3, kind: output, shape index: {}]
  %s4 = sld [smem:[#allocation0]]
  $region49: #{tpu_custom_call.1} parent=0
    _
  %s6 = ssub.s32 1, %s4
  %s7 = scalar_select 0, %s6, %s4
  $region1: #{tpu_custom_call.1} parent=0
    #allocation2 [shape = 'u8[4096]{0}', space=vmem, size = 0x1000, scoped, tag = 'input window, operand 0']
    #allocation3 [shape = 's32[2]{0}', space=sflag, size = 0x8, scoped, tag = 'scoped memory for tpu_custom_call.1']
    #allocation4 [shape = 's32[2]{0}', space=sflag, size = 0x8, scoped, tag = 'scoped memory for tpu_custom_call.1']
    #allocation5 [shape = 'u8[2048]{0}', space=vmem, size = 0x800, scoped, tag = 'output window, operand 0']
    %8 = vsyncpa [#allocation3], 0
    %s9 = scalar_lea.sflag [#allocation3], 1
    %10 = vsyncpa %s9, 0
    %11 = vsyncpa [#allocation4], 0
    %s12 = scalar_lea.sflag [#allocation4], 1
    %13 = vsyncpa %s12, 0
    loop: start=0, step=1, limit=6
    $region2: #{tpu_custom_call.1} parent=1 // loop_pre_header
      _
    $region3: #{tpu_custom_call.1} parent=1 // loop_header
      %s15 = sphi 0, %s19
      %p16 = scmp.ge.s32.totalorder %s15, 6
      %s22 = sphi 0, %s34
      %s23 = sphi 0, %s30
      %s24 = sphi 0, %s22
      %s25 = sphi 0, %s23
      %s26 = sphi 0, %s24
      %s27 = sphi 0, %s25
      %s39 = sphi 0, %s41
      %s42 = sphi 0, %s39
      %s43 = sphi 0, %s42
      %s59 = sphi 0, %s43
      %s63 = sphi 0, %s63
      %s65 = sphi 0, %s63
      %s66 = sphi 0, %s65
      %s80 = sphi 0, %s66
      %s84 = sphi 0, %s84
      %s86 = sphi 0, %s84
      %s87 = sphi 0, %s86
      %s101 = sphi 0, %s87
      %s109 = sphi 0, %s111
      %s112 = sphi 0, %s109
      %s113 = sphi 0, %s112
      %s129 = sphi 0, %s113
    $region4: #{tpu_custom_call.1} parent=1 // loop_header_branch
      %18 = sbr.rel (%p16) target = $region8
    $region5: #{tpu_custom_call.1} parent=1 // loop_body
      %s20 = ssub.s32 %s15, 1
      %s21 = ssub.s32 %s15, 2
      %s28 = sadd.s32 1, %s23
      %p29 = scmp.ge.s32.totalorder %s28, 2
      %s30 = scalar_select %p29, 0, %s28
      %s31 = sadd.s32 1, %s22
      %s32 = scalar_select %p29, %s31, %s22
      %p33 = scmp.ge.s32.totalorder %s32, 2
      %s34 = scalar_select %p33, 0, %s32
      %s35 = ssub.s32 %s22, %s34
      %s36 = ssub.s32 %s23, %s30
      %s37 = sor.u32 %s35, %s36
      %p38 = scmp.eq.s32.totalorder %s37, 0
      %s40 = sadd.s32 %s39, 1
      %s41 = scalar_select %p38, %s39, %s40
      %p44 = pneg %p38
      %p45 = scmp.eq.s32.totalorder %s15, 3
      %p46 = por %p44, %p45
      %p47 = scmp.ne.s32.totalorder %s39, %s42
      %p48 = scmp.eq.s32.totalorder %s15, 0
      %p49 = por %p47, %p48
      %p50 = scmp.ne.s32.totalorder %s39, %s42
      %p51 = scmp.eq.s32.totalorder %s20, 3
      %p52 = por %p50, %p51
      %p53 = scmp.ne.s32.totalorder %s42, %s43
      %p54 = scmp.eq.s32.totalorder %s20, 0
      %p55 = por %p53, %p54
      %p56 = scmp.ne.s32.totalorder %s42, %s43
      %p57 = scmp.eq.s32.totalorder %s21, 3
      %p58 = por %p56, %p57
      %p60 = scmp.ne.s32.totalorder %s43, %s59
      %p61 = scmp.eq.s32.totalorder %s21, 0
      %p62 = por %p60, %p61
      %s64 = sadd.s32 %s63, 1
      %p67 = scmp.eq.s32.totalorder %s15, 3
      %p68 = scmp.ne.s32.totalorder %s63, %s65
      %p69 = scmp.eq.s32.totalorder %s15, 0
      %p70 = por %p68, %p69
      %p71 = scmp.ne.s32.totalorder %s63, %s65
      %p72 = scmp.eq.s32.totalorder %s20, 3
      %p73 = por %p71, %p72
      %p74 = scmp.ne.s32.totalorder %s65, %s66
      %p75 = scmp.eq.s32.totalorder %s20, 0
      %p76 = por %p74, %p75
      %p77 = scmp.ne.s32.totalorder %s65, %s66
      %p78 = scmp.eq.s32.totalorder %s21, 3
      %p79 = por %p77, %p78
      %p81 = scmp.ne.s32.totalorder %s66, %s80
      %p82 = scmp.eq.s32.totalorder %s21, 0
      %p83 = por %p81, %p82
      %s85 = sadd.s32 %s84, 1
      %p88 = scmp.eq.s32.totalorder %s15, 3
      %p89 = scmp.ne.s32.totalorder %s84, %s86
      %p90 = scmp.eq.s32.totalorder %s15, 0
      %p91 = por %p89, %p90
      %p92 = scmp.ne.s32.totalorder %s84, %s86
      %p93 = scmp.eq.s32.totalorder %s20, 3
      %p94 = por %p92, %p93
      %p95 = scmp.ne.s32.totalorder %s86, %s87
      %p96 = scmp.eq.s32.totalorder %s20, 0
      %p97 = por %p95, %p96
      %p98 = scmp.ne.s32.totalorder %s86, %s87
      %p99 = scmp.eq.s32.totalorder %s21, 3
      %p100 = por %p98, %p99
      %p102 = scmp.ne.s32.totalorder %s87, %s101
      %p103 = scmp.eq.s32.totalorder %s21, 0
      %p104 = por %p102, %p103
      %s105 = ssub.s32 %s22, %s34
      %s106 = ssub.s32 %s23, %s30
      %s107 = sor.u32 %s105, %s106
      %p108 = scmp.eq.s32.totalorder %s107, 0
      %s110 = sadd.s32 %s109, 1
      %s111 = scalar_select %p108, %s109, %s110
      %p114 = pneg %p108
      %p115 = scmp.eq.s32.totalorder %s15, 3
      %p116 = por %p114, %p115
      %p117 = scmp.ne.s32.totalorder %s109, %s112
      %p118 = scmp.eq.s32.totalorder %s15, 0
      %p119 = por %p117, %p118
      %p120 = scmp.ne.s32.totalorder %s109, %s112
      %p121 = scmp.eq.s32.totalorder %s20, 3
      %p122 = por %p120, %p121
      %p123 = scmp.ne.s32.totalorder %s112, %s113
      %p124 = scmp.eq.s32.totalorder %s20, 0
      %p125 = por %p123, %p124
      %p126 = scmp.ne.s32.totalorder %s112, %s113
      %p127 = scmp.eq.s32.totalorder %s21, 3
      %p128 = por %p126, %p127
      %p130 = scmp.ne.s32.totalorder %s113, %s129
      %p131 = scmp.eq.s32.totalorder %s21, 0
      %p132 = por %p130, %p131
      %p133 = scmp.le.s32.totalorder 1, %s15
      %p134 = scmp.lt.s32.totalorder %s15, 5
      %p135 = pnand %p133, %p134
      %p136 = pneg %p135
      // Predicated region
      $region9: #{tpu_custom_call.1} parent=5 // pred_check
        _
      $region10: #{tpu_custom_call.1} parent=5 // pred_check_branch
        %138 = sbr.rel (%p135) target = $region12
      $region11: #{tpu_custom_call.1} parent=5 // pred_region
        %s139 = ssub.s32 %s15, 1
        // Predicated region
        $region13: #{tpu_custom_call.1} parent=11 // pred_check
          %p140 = pneg %p76
        $region14: #{tpu_custom_call.1} parent=11 // pred_check_branch
          %142 = sbr.rel (%p140) target = $region16
        $region15: #{tpu_custom_call.1} parent=11 // pred_region
          _
        $region16: #{tpu_custom_call.1} parent=11 // pred_fallthru
          _
        // Predicated region
        $region17: #{tpu_custom_call.1} parent=11 // pred_check
          %p143 = pneg %p97
        $region18: #{tpu_custom_call.1} parent=11 // pred_check_branch
          %145 = sbr.rel (%p143) target = $region20
        $region19: #{tpu_custom_call.1} parent=11 // pred_region
          _
        $region20: #{tpu_custom_call.1} parent=11 // pred_fallthru
          _
      $region12: #{tpu_custom_call.1} parent=5 // pred_fallthru
        _
      %p146 = scmp.lt.s32.totalorder %s15, 4
      // Predicated region
      $region21: #{tpu_custom_call.1} parent=5 // pred_check
        %p147 = pneg %p146
      $region22: #{tpu_custom_call.1} parent=5 // pred_check_branch
        %149 = sbr.rel (%p147) target = $region24
      $region23: #{tpu_custom_call.1} parent=5 // pred_region
        // Predicated region
        $region25: #{tpu_custom_call.1} parent=23 // pred_check
          %p150 = pneg %p49
        $region26: #{tpu_custom_call.1} parent=23 // pred_check_branch
          %152 = sbr.rel (%p150) target = $region28
        $region27: #{tpu_custom_call.1} parent=23 // pred_region
          %s153 = sand.u32 %s39, 1
          %s154 = scalar_lea.sflag [#allocation3], %s153
          %s155 = sand.u32 %s39, 1
          %s156 = smul.addr %s155, 4
          %s157 = scalar_lea.vmem [#allocation2], %s156
          %s159 = ssub.s32 64, 64
          %160 = vsyncadd %s154, %s159
          %s161 = smul.addr %s22, 2
          %s162 = sadd.s32 %s23, %s161
          %s163 = smul.addr %s162, 64
          %s164 = scalar_lea.hbm %s0, %s163
          %s166 = sshll.u32 %s157, 4
          %s167 = int_to_ptr.vmem [resolvable:$true] %s166
          %169 = dma.hbm_to_vmem [thread:$0]  %s164, 64, %s167, %s154
        $region28: #{tpu_custom_call.1} parent=23 // pred_fallthru
          _
      $region24: #{tpu_custom_call.1} parent=5 // pred_fallthru
        _
      %p170 = scmp.le.s32.totalorder 1, %s15
      %p171 = scmp.lt.s32.totalorder %s15, 5
      %p172 = pnand %p170, %p171
      %p173 = pneg %p172
      // Predicated region
      $region29: #{tpu_custom_call.1} parent=5 // pred_check
        _
      $region30: #{tpu_custom_call.1} parent=5 // pred_check_branch
        %175 = sbr.rel (%p172) target = $region32
      $region31: #{tpu_custom_call.1} parent=5 // pred_region
        %s176 = ssub.s32 %s15, 1
        %s177 = sand.u32 %s42, 1
        %s178 = scalar_lea.sflag [#allocation3], %s177
        %s179 = sand.u32 %s42, 1
        %s180 = smul.addr %s179, 4
        %s181 = scalar_lea.vmem [#allocation2], %s180
        // Predicated region
        $region33: #{tpu_custom_call.1} parent=31 // pred_check
          %p182 = pneg %p55
        $region34: #{tpu_custom_call.1} parent=31 // pred_check_branch
          %184 = sbr.rel (%p182) target = $region36
        $region35: #{tpu_custom_call.1} parent=31 // pred_region
          %185 = dma.done %s178, 64
        $region36: #{tpu_custom_call.1} parent=31 // pred_fallthru
          _
        %s186 = sand.u32 %s42, 1
        %s187 = scalar_lea.sflag [#allocation3], %s186
        %s188 = sand.u32 %s42, 1
        %s189 = smul.addr %s188, 4
        %s190 = scalar_lea.vmem [#allocation2], %s189
        %p191 = pneg %p55
        %p192 = pneg %p52
        %p193 = pneg %p76
        %p194 = pneg %p73
        %p195 = pneg %p97
        %p196 = pneg %p94
        %p197 = pneg %p125
        %p198 = pneg %p122
        %s199 = sand.u32 %s112, 1
        %s200 = scalar_lea.sflag [#allocation4], %s199
        %s201 = sand.u32 %s112, 1
        %s202 = smul.addr %s201, 2
        %s203 = scalar_lea.vmem [#allocation5], %s202
        %v204 = vld [vmem:[%s1] sm:$0x3]
        %v205 = vld [vmem:[%s181] sm:$0xf]
        %v206 = vld [vmem:[%s2] sm:$0x3]
        %208 = vset.pattern.permute.xlu0 0
        %209 = vperm.xlu0 %208, %v206
        %v210 = vpop.permute.xlu0 %209
        %vm212 = vcmask 31744
        %v214 = vsel %vm212, %v204, 0
        %vm216 = vcmask 1043456
        %v218 = vsel %vm216, %v205, 0
        %220 = vmatprep.subr.mxu0 0.0
        %221 = vmatpush1.msra.mxu0 %v218
        %222 = vmatprep.subr.mxu0 0.0
        %223 = vmatpush1.msra.mxu0 0.0
        %224 = vmatprep.subr.mxu0 0.0
        %225 = vmatpush1.msra.mxu0 0.0
        %226 = vmatprep.subr.mxu0 0.0
        %227 = vmatpush1.msra.mxu0 0.0
        %228 = vmatprep.subr.mxu0 0.0
        %229 = vmatpush1.msra.mxu0 0.0
        %230 = vmatprep.subr.mxu0 0.0
        %231 = vmatpush1.msra.mxu0 0.0
        %232 = vmatprep.subr.mxu0 0.0
        %233 = vmatpush1.msra.mxu0 0.0
        %234 = vmatprep.subr.mxu0 0.0
        %235 = vmatpush1.msra.mxu0 0.0
        %236 = vmatprep.subr.mxu0 0.0
        %237 = vmatpush1.msra.mxu0 0.0
        %238 = vmatprep.subr.mxu0 0.0
        %239 = vmatpush1.msra.mxu0 0.0
        %240 = vmatprep.subr.mxu0 0.0
        %241 = vmatpush1.msra.mxu0 0.0
        %242 = vmatprep.subr.mxu0 0.0
        %243 = vmatpush1.msra.mxu0 0.0
        %244 = vmatprep.subr.mxu0 0.0
        %245 = vmatpush1.msra.mxu0 0.0
        %246 = vmatprep.subr.mxu0 0.0
        %247 = vmatpush1.msra.mxu0 0.0
        %248 = vmatprep.subr.mxu0 0.0
        %249 = vmatpush1.msra.mxu0 0.0
        %250 = vmatprep.subr.mxu0 0.0
        %251 = vmatpush1.msra.mxu0 0.0
        %252 = vmatprep.subr.mxu0 0.0
        %253 = vmatpush1.msra.mxu0 0.0
        %254 = vmatprep.subr.mxu0 0.0
        %255 = vmatpush1.msra.mxu0 0.0
        %256 = vmatprep.subr.mxu0 0.0
        %257 = vmatpush1.msra.mxu0 0.0
        %258 = vmatprep.subr.mxu0 0.0
        %259 = vmatpush1.msra.mxu0 0.0
        %260 = vmatprep.subr.mxu0 0.0
        %261 = vmatpush1.msra.mxu0 0.0
        %262 = vmatprep.subr.mxu0 0.0
        %263 = vmatpush1.msra.mxu0 0.0
        %264 = vmatprep.subr.mxu0 0.0
        %265 = vmatpush1.msra.mxu0 0.0
        %266 = vmatprep.subr.mxu0 0.0
        %267 = vmatpush1.msra.mxu0 0.0
        %268 = vmatprep.subr.mxu0 0.0
        %269 = vmatpush1.msra.mxu0 0.0
        %270 = vmatprep.subr.mxu0 0.0
        %271 = vmatpush1.msra.mxu0 0.0
        %272 = vmatprep.subr.mxu0 0.0
        %273 = vmatpush1.msra.mxu0 0.0
        %274 = vmatprep.subr.mxu0 0.0
        %275 = vmatpush1.msra.mxu0 0.0
        %276 = vmatprep.subr.mxu0 0.0
        %277 = vmatpush1.msra.mxu0 0.0
        %278 = vmatprep.subr.mxu0 0.0
        %279 = vmatpush1.msra.mxu0 0.0
        %280 = vmatprep.subr.mxu0 0.0
        %281 = vmatpush1.msra.mxu0 0.0
        %282 = vmatprep.subr.mxu0 0.0
        %283 = vmatpush1.msra.mxu0 0.0
        %284 = vmatprep.mubr.f32.mxu0 0.0
        %285 = vmatmul.mubr.f32.gmra.mrb[0].mxu0 %v214
        %v286 = vpop.f32.mrb[0].mxu0
        %v287 = vadd.f32 %v210, %v286
        %v288 = vpop.f32.mrb[0].mxu0
        %289 = vdwg.mxu0
        %290 = vst [vmem:[%s203] sm:$0x3] %v287
        %s291 = sand.u32 %s112, 1
        %s292 = scalar_lea.sflag [#allocation4], %s291
        %s293 = sand.u32 %s112, 1
        %s294 = smul.addr %s293, 2
        %s295 = scalar_lea.vmem [#allocation5], %s294
        // Predicated region
        $region37: #{tpu_custom_call.1} parent=31 // pred_check
          %p296 = pneg %p122
        $region38: #{tpu_custom_call.1} parent=31 // pred_check_branch
          %298 = sbr.rel (%p296) target = $region40
        $region39: #{tpu_custom_call.1} parent=31 // pred_region
          %s300 = ssub.s32 32, 32
          %301 = vsyncadd %s292, %s300
          %s302 = smul.addr %s24, 2
          %s303 = sadd.s32 %s25, %s302
          %s304 = smul.addr %s303, 32
          %s305 = scalar_lea.hbm %s3, %s304
          %s307 = sshll.u32 %s295, 4
          %s308 = int_to_ptr.vmem [resolvable:$true] %s307
          %310 = dma.vmem_to_hbm [thread:$0]  %s308, 32, %s305, %s292
        $region40: #{tpu_custom_call.1} parent=31 // pred_fallthru
          _
      $region32: #{tpu_custom_call.1} parent=5 // pred_fallthru
        _
      %p311 = scmp.le.s32.totalorder 2, %s15
      // Predicated region
      $region41: #{tpu_custom_call.1} parent=5 // pred_check
        %p312 = pneg %p311
      $region42: #{tpu_custom_call.1} parent=5 // pred_check_branch
        %314 = sbr.rel (%p312) target = $region44
      $region43: #{tpu_custom_call.1} parent=5 // pred_region
        %s315 = ssub.s32 %s15, 2
        // Predicated region
        $region45: #{tpu_custom_call.1} parent=43 // pred_check
          %p316 = pneg %p128
        $region46: #{tpu_custom_call.1} parent=43 // pred_check_branch
          %318 = sbr.rel (%p316) target = $region48
        $region47: #{tpu_custom_call.1} parent=43 // pred_region
          %s319 = sand.u32 %s113, 1
          %s320 = scalar_lea.sflag [#allocation4], %s319
          %s321 = sand.u32 %s113, 1
          %s322 = smul.addr %s321, 2
          %s323 = scalar_lea.vmem [#allocation5], %s322
          %324 = dma.done %s320, 32
        $region48: #{tpu_custom_call.1} parent=43 // pred_fallthru
          _
      $region44: #{tpu_custom_call.1} parent=5 // pred_fallthru
        _
    $region6: #{tpu_custom_call.1} parent=1 // loop_footer
      %s19 = sadd.s32 1, %s15
    $region7: #{tpu_custom_call.1} parent=1 // loop_footer_branch
      %14 = sbr.rel target = $region3
    $region8: #{tpu_custom_call.1} parent=1 // loop_exit
      _
    %325 = vsyncpa [#allocation3], 1
    %s326 = scalar_lea.sflag [#allocation3], 1
    %327 = vsyncpa %s326, 1
    %328 = vsyncpa [#allocation4], 1
    %s329 = scalar_lea.sflag [#allocation4], 1
    %330 = vsyncpa %s329, 1

</llo_original>
